<compile_context>
chip_gen: v5e
topology: v5e:2x2
jax: 0.10.0
libtpu: 0.0.40
codegen_flags: <defaults>
</compile_context>

<pallas_src>
import jax
import jax.numpy as jnp
from jax.experimental import pallas as pl
from jax.experimental.pallas import tpu as pltpu

LN_EPS = 1e-5


def ln_kernel(x_ref, gamma_ref, beta_ref, y_ref):
    # x_ref: (t, D) input rows; gamma/beta: (1, D); y_ref: (t, D) bf16 output.
    x = x_ref[...].astype(jnp.float32)
    mean = jnp.mean(x, axis=-1, keepdims=True)
    cent = x - mean
    var = jnp.mean(cent * cent, axis=-1, keepdims=True)     # biased, matches torch LN
    y = cent * jax.lax.rsqrt(var + LN_EPS)
    y = y * gamma_ref[...] + beta_ref[...]
    y_ref[...] = y.astype(y_ref.dtype)


def mix_kernel(y_ref, w_ref, bias_ref, o_ref, acc_ref):
    # y_ref:    (N, D)  bf16 full token row for this batch element (resident, 1 DMA / b)
    # w_ref:    (t, t)  bf16 token-mix weight tile (rows: n tile, cols: k tile)
    # bias_ref: (t, 1)  f32 fc bias rows for this n tile
    # o_ref:    (t, D)  output tile
    # acc_ref:  (t, D)  f32 accumulator scratch
    n_idx = pl.program_id(1)
    k_idx = pl.program_id(2)
    t = w_ref.shape[0]

    # Causal skip: W[n-tile, k-tile] is all-zero for k > n (strictly lower-tri Toeplitz).
    @pl.when(k_idx <= n_idx)
    def _():
        off = pl.multiple_of(k_idx * t, t)
        y_blk = y_ref[pl.ds(off, t), :]                      # (t, D) bf16, sublane slice
        prod = jnp.dot(w_ref[...], y_blk, preferred_element_type=jnp.float32)

        @pl.when(k_idx == 0)
        def _():
            acc_ref[...] = prod                              # merged zero-init

        @pl.when(k_idx > 0)
        def _():
            acc_ref[...] += prod

    # Last productive contraction step for this n tile: bias add + store.
    @pl.when(k_idx == n_idx)
    def _():
        o_ref[...] = (acc_ref[...] + bias_ref[...]).astype(o_ref.dtype)


def _pick_token_tile(n):
    """Full N for small N (grid collapses); else largest of 512/256/128 dividing N."""
    if n <= 512:
        return n
    for t in (512, 256, 128):
        if n % t == 0:
            return t
    # TODO(synk): pad/mask the last tile for n_ctx not a multiple of 128 instead of
    # falling back to a full-size (potentially VMEM-busting) tile.
    return n


def spatial_gating_unit(x, w, gamma, beta, bias, *, t=None):
    B, N, D = x.shape
    assert w.shape == (N, N)

    t = _pick_token_tile(N) if t is None else t
    assert N % t == 0, "token tile must divide n_ctx"
    n_tiles = N // t

    # Host-side prep. In a real module the bf16 W copy / reshapes are made once and cached.
    w_bf16 = w.astype(jnp.bfloat16)
    gamma2 = gamma.reshape(1, D).astype(jnp.float32)
    beta2 = beta.reshape(1, D).astype(jnp.float32)
    bias2 = bias.reshape(N, 1).astype(jnp.float32)

    # ---- Pass 1: LayerNorm over D, emitted in bf16 --------------------------------
    y = pl.pallas_call(
        ln_kernel,
        out_shape=jax.ShapeDtypeStruct((B, N, D), jnp.bfloat16),
        grid_spec=pltpu.PrefetchScalarGridSpec(
            num_scalar_prefetch=0,
            grid=(B, n_tiles),
            in_specs=[
                pl.BlockSpec((None, t, D), lambda b, r: (b, r, 0)),
                pl.BlockSpec((1, D), lambda b, r: (0, 0)),
                pl.BlockSpec((1, D), lambda b, r: (0, 0)),
            ],
            out_specs=pl.BlockSpec((None, t, D), lambda b, r: (b, r, 0)),
        ),
        compiler_params=pltpu.CompilerParams(
            dimension_semantics=("parallel", "parallel")),
    )(x, gamma2, beta2)

    # ---- Pass 2: causal token mixing -----------------------------------------------
    out_itemsize = jnp.dtype(x.dtype).itemsize
    vmem_bytes = (
        2 * N * D * 2                 # resident y row (bf16, double-buffered)
        + 2 * t * t * 2               # W tiles (bf16, double-buffered)
        + 2 * t * 128 * 4             # bias tiles (f32, lane-padded to 128)
        + 2 * t * D * out_itemsize    # output tiles
        + t * D * 4                   # f32 accumulator scratch
    )
    # 2x headroom for semaphores / internal scratch; capped below v7x's 64 MiB physical.
    vmem_limit = int(min(max(2 * vmem_bytes, 8 * 1024 * 1024), 56 * 1024 * 1024))
    # TODO(synk): for very large N*D the resident bf16 y row (2*N*D*2 bytes) can exceed
    # v7x's VMEM budget; block D as a fourth grid axis in that regime.
    # (pipeline_mode=pl.Buffered(3) on the W spec is a cheap knob to sweep if DMA
    #  latency shows up exposed on v5e/v7x.)

    return pl.pallas_call(
        mix_kernel,
        out_shape=jax.ShapeDtypeStruct((B, N, D), x.dtype),
        grid_spec=pltpu.PrefetchScalarGridSpec(
            num_scalar_prefetch=0,
            grid=(B, n_tiles, n_tiles),
            in_specs=[
                # y: block index is constant in (n, k) -> one DMA per batch element.
                pl.BlockSpec((None, N, D), lambda b, n, k: (b, 0, 0)),
                # W: k clamped to n so causally-skipped tiles dedup to the k==n fetch.
                pl.BlockSpec((t, t), lambda b, n, k: (n, jnp.minimum(k, n))),
                pl.BlockSpec((t, 1), lambda b, n, k: (n, 0)),
            ],
            out_specs=pl.BlockSpec((None, t, D), lambda b, n, k: (b, n, 0)),
            scratch_shapes=[pltpu.VMEM((t, D), jnp.float32)],
        ),
        compiler_params=pltpu.CompilerParams(
            # No cross-n state -> batch AND token-tile axes are megacore-shardable
            # (matters on v7x's 2 TensorCores at small batch); k is the reduction.
            dimension_semantics=("parallel", "parallel", "arbitrary"),
            vmem_limit_bytes=vmem_limit,
        ),
    )(y, w_bf16, bias2)


def reference(x, w, gamma, beta, bias):
    mean = jnp.mean(x, axis=-1, keepdims=True)
    var = jnp.mean((x - mean) ** 2, axis=-1, keepdims=True)
    y = (x - mean) / jnp.sqrt(var + LN_EPS) * gamma + beta
    # out[b, n, d] = sum_m W[n, m] y[b, m, d] + bias[n]
    return jnp.einsum("nm,bmd->bnd", w, y) + bias[None, :, None]


def init_params(key, n_ctx, embedding_dim, w_std=1e-6):
    D = 4 * embedding_dim
    # LayerNorm: weight=1, bias=0 (per _weights_init)
    gamma = jnp.ones((D,), jnp.float32)
    beta = jnp.zeros((D,), jnp.float32)
    # fc_causal weight: tril(toeplitz(v)); the module uses std=1e-6 -- w_std is kept as
    # a parameter so the test can use a larger std and actually exercise the matmul.
    v = w_std * jax.random.normal(key, (n_ctx,), jnp.float32)
    i = jnp.arange(n_ctx)[:, None]
    j = jnp.arange(n_ctx)[None, :]
    w = jnp.where(i >= j, v[jnp.clip(i - j, 0, n_ctx - 1)], 0.0)  # lower-tri toeplitz
    bias = jnp.ones((n_ctx,), jnp.float32)
    return w, gamma, beta, bias


if __name__ == "__main__":
    key = jax.random.PRNGKey(0)

    # (B, n_ctx, embedding_dim, w_std, token-tile override)
    configs = [
        (2, 16, 8, 0.1, None),     # toy module shape; single-tile path
        (2, 512, 32, 0.02, None),  # default tiling: grid collapses to (B, 1, 1)
        (2, 512, 32, 0.02, 128),   # forced multi-tile: exercises the causal skip and
                                   # clamped-index DMA dedup path, grid (2, 4, 4)
    ]
    for (B, n_ctx, embedding_dim, w_std, t) in configs:
        D = 4 * embedding_dim
        kx, kw, key = jax.random.split(key, 3)
        x = jax.random.normal(kx, (B, n_ctx, D), jnp.float32)
        w, gamma, beta, bias = init_params(kw, n_ctx, embedding_dim, w_std=w_std)

        out = spatial_gating_unit(x, w, gamma, beta, bias, t=t)
        out = jax.block_until_ready(out)
        ref = reference(x, w, gamma, beta, bias)

        assert out.shape == (B, n_ctx, D)
        # bf16 MXU operands with f32 accumulation: expected abs error ~3e-3 at these
        # scales vs the f32 reference; 2e-2 tolerance leaves margin.
        assert jnp.allclose(out, ref, atol=2e-2, rtol=2e-2), (
            f"mismatch vs reference at shape {(B, n_ctx, D)}, tile={t}")

    print("KERNEL_OK")
</pallas_src>

<mosaic_0001>
module attributes {stable_mosaic.version = 11 : i64} {
  func.func @ln_kernel(%arg0: i32, %arg1: i32, %arg2: memref<1x16x32xf32, #tpu.memory_space<vmem>>, %arg3: memref<1x32xf32, #tpu.memory_space<vmem>>, %arg4: memref<1x32xf32, #tpu.memory_space<vmem>>, %arg5: memref<1x16x32xbf16, #tpu.memory_space<vmem>>) attributes {dimension_semantics = [#tpu.dimension_semantics<parallel>, #tpu.dimension_semantics<parallel>], iteration_bounds = array<i64: 2, 1>, scalar_prefetch = 0 : i64, scratch_operands = 0 : i64, tpu.core_type = #tpu.core_type<tc>, window_params = [{transform_indices = @transform_0, window_bounds = array<i64: 1, 16, 32>}, {pipeline_mode = #tpu.pipeline_mode<synchronous>, transform_indices = @transform_1, window_bounds = array<i64: 1, 32>}, {pipeline_mode = #tpu.pipeline_mode<synchronous>, transform_indices = @transform_2, window_bounds = array<i64: 1, 32>}, {transform_indices = @transform_3, window_bounds = array<i64: 1, 16, 32>}]} {
    %c0 = arith.constant 0 : index
    %c0_0 = arith.constant 0 : index
    %c0_1 = arith.constant 0 : index
    %0 = vector.load %arg2[%c0, %c0_0, %c0_1] : memref<1x16x32xf32, #tpu.memory_space<vmem>>, vector<1x16x32xf32>
    %1 = vector.shape_cast %0 : vector<1x16x32xf32> to vector<16x32xf32>
    %cst = arith.constant dense<0.000000e+00> : vector<16xf32>
    %2 = vector.multi_reduction <add>, %1, %cst [1] : vector<16x32xf32> to vector<16xf32>
    %3 = vector.shape_cast %2 : vector<16xf32> to vector<16x1xf32>
    %cst_2 = arith.constant 3.200000e+01 : f32
    %4 = vector.broadcast %cst_2 : f32 to vector<16x1xf32>
    %5 = arith.divf %3, %4 : vector<16x1xf32>
    %6 = vector.broadcast %5 : vector<16x1xf32> to vector<16x32xf32>
    %7 = arith.subf %1, %6 : vector<16x32xf32>
    %8 = arith.mulf %7, %7 : vector<16x32xf32>
    %cst_3 = arith.constant dense<0.000000e+00> : vector<16xf32>
    %9 = vector.multi_reduction <add>, %8, %cst_3 [1] : vector<16x32xf32> to vector<16xf32>
    %10 = vector.shape_cast %9 : vector<16xf32> to vector<16x1xf32>
    %cst_4 = arith.constant 3.200000e+01 : f32
    %11 = vector.broadcast %cst_4 : f32 to vector<16x1xf32>
    %12 = arith.divf %10, %11 : vector<16x1xf32>
    %cst_5 = arith.constant 9.99999974E-6 : f32
    %13 = vector.broadcast %cst_5 : f32 to vector<16x1xf32>
    %14 = arith.addf %12, %13 : vector<16x1xf32>
    %15 = math.rsqrt %14 : vector<16x1xf32>
    %16 = vector.broadcast %15 : vector<16x1xf32> to vector<16x32xf32>
    %17 = arith.mulf %7, %16 : vector<16x32xf32>
    %c0_6 = arith.constant 0 : index
    %c0_7 = arith.constant 0 : index
    %18 = vector.load %arg3[%c0_6, %c0_7] : memref<1x32xf32, #tpu.memory_space<vmem>>, vector<1x32xf32>
    %19 = vector.broadcast %18 : vector<1x32xf32> to vector<16x32xf32>
    %20 = arith.mulf %17, %19 : vector<16x32xf32>
    %c0_8 = arith.constant 0 : index
    %c0_9 = arith.constant 0 : index
    %21 = vector.load %arg4[%c0_8, %c0_9] : memref<1x32xf32, #tpu.memory_space<vmem>>, vector<1x32xf32>
    %22 = vector.broadcast %21 : vector<1x32xf32> to vector<16x32xf32>
    %23 = arith.addf %20, %22 : vector<16x32xf32>
    %24 = arith.truncf %23 : vector<16x32xf32> to vector<16x32xbf16>
    %c0_10 = arith.constant 0 : index
    %c0_11 = arith.constant 0 : index
    %c0_12 = arith.constant 0 : index
    %25 = vector.load %arg5[%c0_10, %c0_11, %c0_12] : memref<1x16x32xbf16, #tpu.memory_space<vmem>>, vector<1x16x32xbf16>
    %26 = vector.shape_cast %25 : vector<1x16x32xbf16> to vector<16x32xbf16>
    %27 = vector.shape_cast %24 : vector<16x32xbf16> to vector<1x16x32xbf16>
    tpu.vector_store %arg5[%c0_10, %c0_11, %c0_12], %27 {strides = array<i32>} : memref<1x16x32xbf16, #tpu.memory_space<vmem>>, vector<1x16x32xbf16>,
    return
  }
  func.func @transform_0(%arg0: i32, %arg1: i32) -> (i32, i32, i32) {
    %c0_i32 = arith.constant 0 : i32
    %c0_i32_0 = arith.constant 0 : i32
    return %arg0, %arg1, %c0_i32 : i32, i32, i32
  }
  func.func @transform_1(%arg0: i32, %arg1: i32) -> (i32, i32) {
    %c0_i32 = arith.constant 0 : i32
    %c0_i32_0 = arith.constant 0 : i32
    %c0_i32_1 = arith.constant 0 : i32
    return %c0_i32, %c0_i32_0 : i32, i32
  }
  func.func @transform_2(%arg0: i32, %arg1: i32) -> (i32, i32) {
    %c0_i32 = arith.constant 0 : i32
    %c0_i32_0 = arith.constant 0 : i32
    %c0_i32_1 = arith.constant 0 : i32
    return %c0_i32, %c0_i32_0 : i32, i32
  }
  func.func @transform_3(%arg0: i32, %arg1: i32) -> (i32, i32, i32) {
    %c0_i32 = arith.constant 0 : i32
    %c0_i32_0 = arith.constant 0 : i32
    return %arg0, %arg1, %c0_i32 : i32, i32, i32
  }
}

</mosaic_0001>

<llo_original>
// kernel: tpu_custom_call.1
$region0: #{tpu_custom_call.1}
  #allocation0 [shape = 'u32[]', space=smem, size = 0x4, offset = 0x4, fixed_abs, tag = 'smem constant byte address 0x4 - core index']
  #allocation1 [shape = 'u32[72,128]{1,0:T(1,128)}', space=vmem, size = 0x9000, scoped, tag = 'internal scratch']
  %s0 = inlined_call_operand.hbm [shape: f32[2,16,32], index: 0, kind: input, shape index: {}]
  %s1 = inlined_call_operand.hbm [shape: f32[1,32], index: 1, kind: input, shape index: {}]
  %s2 = inlined_call_operand.vmem [shape: f32[1,32], index: 2, kind: input, shape index: {}]
  %s3 = inlined_call_operand.hbm [shape: bf16[2,16,32], index: 3, kind: output, shape index: {}]
  %s4 = sld [smem:[#allocation0]]
  $region53: #{tpu_custom_call.1} parent=0
    _
  %s6 = ssub.s32 1, %s4
  %s7 = scalar_select 0, %s6, %s4
  $region1: #{tpu_custom_call.1} parent=0
    #allocation2 [shape = 'u8[16384]{0}', space=vmem, size = 0x4000, scoped, tag = 'input window, operand 0']
    #allocation3 [shape = 's32[2]{0}', space=sflag, size = 0x8, scoped, tag = 'scoped memory for tpu_custom_call.1']
    #allocation4 [shape = 's32[2]{0}', space=sflag, size = 0x8, scoped, tag = 'scoped memory for tpu_custom_call.1']
    #allocation5 [shape = 'u8[512]{0}', space=vmem, size = 0x400, scoped, tag = 'input window, operand 1, single buffered']
    #allocation6 [shape = 's32[1]{0}', space=sflag, size = 0x4, scoped, tag = 'scoped memory for tpu_custom_call.1']
    #allocation7 [shape = 'u8[8192]{0}', space=vmem, size = 0x2000, scoped, tag = 'output window, operand 0']
    %8 = vsyncpa [#allocation3], 0
    %s9 = scalar_lea.sflag [#allocation3], 1
    %10 = vsyncpa %s9, 0
    %11 = vsyncpa [#allocation6], 0
    %12 = vsyncpa [#allocation4], 0
    %s13 = scalar_lea.sflag [#allocation4], 1
    %14 = vsyncpa %s13, 0
    loop: start=0, step=1, limit=4
    $region2: #{tpu_custom_call.1} parent=1 // loop_pre_header
      _
    $region3: #{tpu_custom_call.1} parent=1 // loop_header
      %s16 = sphi 0, %s20
      %p17 = scmp.ge.s32.totalorder %s16, 4
      %s23 = sphi 0, %s35
      %s24 = sphi 0, %s31
      %s25 = sphi 0, %s23
      %s26 = sphi 0, %s24
      %s27 = sphi 0, %s25
      %s28 = sphi 0, %s26
      %s40 = sphi 0, %s42
      %s43 = sphi 0, %s40
      %s44 = sphi 0, %s43
      %s60 = sphi 0, %s44
      %s64 = sphi 0, %s64
      %s66 = sphi 0, %s64
      %s67 = sphi 0, %s66
      %s81 = sphi 0, %s67
      %s85 = sphi 0, %s85
      %s87 = sphi 0, %s85
      %s88 = sphi 0, %s87
      %s102 = sphi 0, %s88
      %s110 = sphi 0, %s112
      %s113 = sphi 0, %s110
      %s114 = sphi 0, %s113
      %s130 = sphi 0, %s114
    $region4: #{tpu_custom_call.1} parent=1 // loop_header_branch
      %19 = sbr.rel (%p17) target = $region8
    $region5: #{tpu_custom_call.1} parent=1 // loop_body
      %s21 = ssub.s32 %s16, 1
      %s22 = ssub.s32 %s16, 2
      %s29 = sadd.s32 1, %s24
      %p30 = scmp.ge.s32.totalorder %s29, 1
      %s31 = scalar_select %p30, 0, %s29
      %s32 = sadd.s32 1, %s23
      %s33 = scalar_select %p30, %s32, %s23
      %p34 = scmp.ge.s32.totalorder %s33, 2
      %s35 = scalar_select %p34, 0, %s33
      %s36 = ssub.s32 %s23, %s35
      %s37 = ssub.s32 %s24, %s31
      %s38 = sor.u32 %s36, %s37
      %p39 = scmp.eq.s32.totalorder %s38, 0
      %s41 = sadd.s32 %s40, 1
      %s42 = scalar_select %p39, %s40, %s41
      %p45 = pneg %p39
      %p46 = scmp.eq.s32.totalorder %s16, 1
      %p47 = por %p45, %p46
      %p48 = scmp.ne.s32.totalorder %s40, %s43
      %p49 = scmp.eq.s32.totalorder %s16, 0
      %p50 = por %p48, %p49
      %p51 = scmp.ne.s32.totalorder %s40, %s43
      %p52 = scmp.eq.s32.totalorder %s21, 1
      %p53 = por %p51, %p52
      %p54 = scmp.ne.s32.totalorder %s43, %s44
      %p55 = scmp.eq.s32.totalorder %s21, 0
      %p56 = por %p54, %p55
      %p57 = scmp.ne.s32.totalorder %s43, %s44
      %p58 = scmp.eq.s32.totalorder %s22, 1
      %p59 = por %p57, %p58
      %p61 = scmp.ne.s32.totalorder %s44, %s60
      %p62 = scmp.eq.s32.totalorder %s22, 0
      %p63 = por %p61, %p62
      %s65 = sadd.s32 %s64, 1
      %p68 = scmp.eq.s32.totalorder %s16, 1
      %p69 = scmp.ne.s32.totalorder %s64, %s66
      %p70 = scmp.eq.s32.totalorder %s16, 0
      %p71 = por %p69, %p70
      %p72 = scmp.ne.s32.totalorder %s64, %s66
      %p73 = scmp.eq.s32.totalorder %s21, 1
      %p74 = por %p72, %p73
      %p75 = scmp.ne.s32.totalorder %s66, %s67
      %p76 = scmp.eq.s32.totalorder %s21, 0
      %p77 = por %p75, %p76
      %p78 = scmp.ne.s32.totalorder %s66, %s67
      %p79 = scmp.eq.s32.totalorder %s22, 1
      %p80 = por %p78, %p79
      %p82 = scmp.ne.s32.totalorder %s67, %s81
      %p83 = scmp.eq.s32.totalorder %s22, 0
      %p84 = por %p82, %p83
      %s86 = sadd.s32 %s85, 1
      %p89 = scmp.eq.s32.totalorder %s16, 1
      %p90 = scmp.ne.s32.totalorder %s85, %s87
      %p91 = scmp.eq.s32.totalorder %s16, 0
      %p92 = por %p90, %p91
      %p93 = scmp.ne.s32.totalorder %s85, %s87
      %p94 = scmp.eq.s32.totalorder %s21, 1
      %p95 = por %p93, %p94
      %p96 = scmp.ne.s32.totalorder %s87, %s88
      %p97 = scmp.eq.s32.totalorder %s21, 0
      %p98 = por %p96, %p97
      %p99 = scmp.ne.s32.totalorder %s87, %s88
      %p100 = scmp.eq.s32.totalorder %s22, 1
      %p101 = por %p99, %p100
      %p103 = scmp.ne.s32.totalorder %s88, %s102
      %p104 = scmp.eq.s32.totalorder %s22, 0
      %p105 = por %p103, %p104
      %s106 = ssub.s32 %s23, %s35
      %s107 = ssub.s32 %s24, %s31
      %s108 = sor.u32 %s106, %s107
      %p109 = scmp.eq.s32.totalorder %s108, 0
      %s111 = sadd.s32 %s110, 1
      %s112 = scalar_select %p109, %s110, %s111
      %p115 = pneg %p109
      %p116 = scmp.eq.s32.totalorder %s16, 1
      %p117 = por %p115, %p116
      %p118 = scmp.ne.s32.totalorder %s110, %s113
      %p119 = scmp.eq.s32.totalorder %s16, 0
      %p120 = por %p118, %p119
      %p121 = scmp.ne.s32.totalorder %s110, %s113
      %p122 = scmp.eq.s32.totalorder %s21, 1
      %p123 = por %p121, %p122
      %p124 = scmp.ne.s32.totalorder %s113, %s114
      %p125 = scmp.eq.s32.totalorder %s21, 0
      %p126 = por %p124, %p125
      %p127 = scmp.ne.s32.totalorder %s113, %s114
      %p128 = scmp.eq.s32.totalorder %s22, 1
      %p129 = por %p127, %p128
      %p131 = scmp.ne.s32.totalorder %s114, %s130
      %p132 = scmp.eq.s32.totalorder %s22, 0
      %p133 = por %p131, %p132
      %p134 = scmp.le.s32.totalorder 1, %s16
      %p135 = scmp.lt.s32.totalorder %s16, 3
      %p136 = pnand %p134, %p135
      %p137 = pneg %p136
      // Predicated region
      $region9: #{tpu_custom_call.1} parent=5 // pred_check
        _
      $region10: #{tpu_custom_call.1} parent=5 // pred_check_branch
        %139 = sbr.rel (%p136) target = $region12
      $region11: #{tpu_custom_call.1} parent=5 // pred_region
        %s140 = ssub.s32 %s16, 1
        // Predicated region
        $region13: #{tpu_custom_call.1} parent=11 // pred_check
          %p141 = pneg %p77
        $region14: #{tpu_custom_call.1} parent=11 // pred_check_branch
          %143 = sbr.rel (%p141) target = $region16
        $region15: #{tpu_custom_call.1} parent=11 // pred_region
          %145 = vsyncadd [#allocation6], 0
          %s147 = sshll.u32 %s1, 4
          %s148 = int_to_ptr.hbm [resolvable:$true] %s147
          %s149 = sshll.u32 [#allocation5], 4
          %s150 = int_to_ptr.vmem [resolvable:$true] %s149
          %152 = dma.hbm_to_vmem [thread:$0]  %s148, 16, %s150, [#allocation6]
        $region16: #{tpu_custom_call.1} parent=11 // pred_fallthru
          _
        // Predicated region
        $region17: #{tpu_custom_call.1} parent=11 // pred_check
          %p153 = pneg %p98
        $region18: #{tpu_custom_call.1} parent=11 // pred_check_branch
          %155 = sbr.rel (%p153) target = $region20
        $region19: #{tpu_custom_call.1} parent=11 // pred_region
          _
        $region20: #{tpu_custom_call.1} parent=11 // pred_fallthru
          _
      $region12: #{tpu_custom_call.1} parent=5 // pred_fallthru
        _
      %p156 = scmp.lt.s32.totalorder %s16, 2
      // Predicated region
      $region21: #{tpu_custom_call.1} parent=5 // pred_check
        %p157 = pneg %p156
      $region22: #{tpu_custom_call.1} parent=5 // pred_check_branch
        %159 = sbr.rel (%p157) target = $region24
      $region23: #{tpu_custom_call.1} parent=5 // pred_region
        // Predicated region
        $region25: #{tpu_custom_call.1} parent=23 // pred_check
          %p160 = pneg %p50
        $region26: #{tpu_custom_call.1} parent=23 // pred_check_branch
          %162 = sbr.rel (%p160) target = $region28
        $region27: #{tpu_custom_call.1} parent=23 // pred_region
          %s163 = sand.u32 %s40, 1
          %s164 = scalar_lea.sflag [#allocation3], %s163
          %s165 = sand.u32 %s40, 1
          %s166 = smul.addr %s165, 16
          %s167 = scalar_lea.vmem [#allocation2], %s166
          %s168 = smul.u32 2, %s24
          %170 = vsyncadd %s164, 0
          %s171 = smul.addr %s23, 2
          %s172 = sadd.s32 %s168, %s171
          %s173 = smul.addr %s172, 8
          %s174 = scalar_lea.hbm %s0, %s173
          %s175 = sshll.u32 %s174, 4
          %s176 = int_to_ptr.hbm [resolvable:$true] %s175
          %s177 = sshll.u32 %s167, 4
          %s178 = int_to_ptr.vmem [resolvable:$true] %s177
          %183 = dma.hbm_to_vmem [thread:$0]  %s176, 256, %s178, %s164, 128, 128, 8
        $region28: #{tpu_custom_call.1} parent=23 // pred_fallthru
          _
      $region24: #{tpu_custom_call.1} parent=5 // pred_fallthru
        _
      %p184 = scmp.le.s32.totalorder 1, %s16
      %p185 = scmp.lt.s32.totalorder %s16, 3
      %p186 = pnand %p184, %p185
      %p187 = pneg %p186
      // Predicated region
      $region29: #{tpu_custom_call.1} parent=5 // pred_check
        _
      $region30: #{tpu_custom_call.1} parent=5 // pred_check_branch
        %189 = sbr.rel (%p186) target = $region32
      $region31: #{tpu_custom_call.1} parent=5 // pred_region
        %s190 = ssub.s32 %s16, 1
        %s191 = sand.u32 %s43, 1
        %s192 = scalar_lea.sflag [#allocation3], %s191
        %s193 = sand.u32 %s43, 1
        %s194 = smul.addr %s193, 16
        %s195 = scalar_lea.vmem [#allocation2], %s194
        // Predicated region
        $region33: #{tpu_custom_call.1} parent=31 // pred_check
          %p196 = pneg %p56
        $region34: #{tpu_custom_call.1} parent=31 // pred_check_branch
          %198 = sbr.rel (%p196) target = $region36
        $region35: #{tpu_custom_call.1} parent=31 // pred_region
          %200 = dma.done %s192, 256
        $region36: #{tpu_custom_call.1} parent=31 // pred_fallthru
          _
        // Predicated region
        $region37: #{tpu_custom_call.1} parent=31 // pred_check
          %p201 = pneg %p77
        $region38: #{tpu_custom_call.1} parent=31 // pred_check_branch
          %203 = sbr.rel (%p201) target = $region40
        $region39: #{tpu_custom_call.1} parent=31 // pred_region
          %205 = dma.done [#allocation6], 16
        $region40: #{tpu_custom_call.1} parent=31 // pred_fallthru
          _
        %s206 = sand.u32 %s43, 1
        %s207 = scalar_lea.sflag [#allocation3], %s206
        %s208 = sand.u32 %s43, 1
        %s209 = smul.addr %s208, 16
        %s210 = scalar_lea.vmem [#allocation2], %s209
        %p211 = pneg %p56
        %p212 = pneg %p53
        %p213 = pneg %p77
        %p214 = pneg %p74
        %p215 = pneg %p98
        %p216 = pneg %p95
        %p217 = pneg %p126
        %p218 = pneg %p123
        %s219 = sand.u32 %s113, 1
        %s220 = scalar_lea.sflag [#allocation4], %s219
        %s221 = sand.u32 %s113, 1
        %s222 = smul.addr %s221, 8
        %s223 = scalar_lea.vmem [#allocation7], %s222
        %s224 = smul.u32 2, %s26
        %s225 = smul.u32 2, %s26
        %v226 = vld [vmem:[%s195] sm:$0xff]
        %v227 = vld [vmem:[%s195 + $0x8] sm:$0xff]
        %vm228 = vcmask 261120
        %v229 = vsel %vm228, %v226, 0.0
        %230 = vadd.xlane.f32.xlu0 %v229
        %v231 = vpop.xlane.xlu0 %230
        %v232 = vsel %vm228, %v227, 0.0
        %233 = vadd.xlane.f32.xlu0 %v232
        %v234 = vpop.xlane.xlu0 %233
        %v235 = vrcp.pop 32.0
        %v236 = vmul.f32 32.0, %v235
        %v237 = vsub.f32 1.0, %v236
        %v238 = vmul.f32 %v235, %v237
        %v239 = vadd.f32 %v235, %v238
        %vm240 = vweird.f32 %v235
        %v241 = vsel %vm240, %v235, %v239
        %v242 = vmul.f32 %v231, %v241
        %v243 = vmul.f32 %v234, %v241
        %v244 = vsub.f32 %v226, %v242
        %v245 = vsub.f32 %v227, %v243
        %v246 = vmul.f32 %v244, %v244
        %v247 = vmul.f32 %v245, %v245
        %v248 = vsel %vm228, %v246, 0.0
        %249 = vadd.xlane.f32.xlu0 %v248
        %v250 = vpop.xlane.xlu0 %249
        %v251 = vsel %vm228, %v247, 0.0
        %252 = vadd.xlane.f32.xlu0 %v251
        %v253 = vpop.xlane.xlu0 %252
        %v254 = vmul.f32 %v250, %v241
        %v255 = vmul.f32 %v253, %v241
        %v256 = vadd.f32 %v254, 1e-05
        %v257 = vadd.f32 %v255, 1e-05
        %v258 = vrsqrt.pop %v256
        %v259 = vmul.f32 %v258, %v256
        %v260 = vmul.f32 %v259, %v258
        %v261 = vmul.f32 0.5, %v260
        %v262 = vsub.f32 1.5, %v261
        %v263 = vmul.f32 %v258, %v262
        %vm264 = vweird.f32 %v256
        %vm265 = vweird.f32 %v258
        %vm266 = vmor %vm264, %vm265
        %v267 = vsel %vm266, %v258, %v263
        %v268 = vrsqrt.pop %v257
        %v269 = vmul.f32 %v268, %v257
        %v270 = vmul.f32 %v269, %v268
        %v271 = vmul.f32 0.5, %v270
        %v272 = vsub.f32 1.5, %v271
        %v273 = vmul.f32 %v268, %v272
        %vm274 = vweird.f32 %v257
        %vm275 = vweird.f32 %v268
        %vm276 = vmor %vm274, %vm275
        %v277 = vsel %vm276, %v268, %v273
        %v278 = vmul.f32 %v244, %v267
        %v279 = vmul.f32 %v245, %v277
        %v280 = vld [vmem:[#allocation5] sm:$0x1]
        %v282 = vperm.slane %v280, 0
        %v284 = vmul.f32 %v278, %v282
        %v285 = vmul.f32 %v279, %v282
        %v286 = vld [vmem:[%s2] sm:$0x1]
        %v288 = vperm.slane %v286, 0
        %v290 = vadd.f32 %v284, %v288
        %v291 = vadd.f32 %v285, %v288
        %v292 = vpack.c.bf16 %v290, %v290
        %v293 = vpack.c.bf16 %v291, %v291
        %vm294 = vcmask 257024
        %295 = vst.msk [vmem:[%s223] sm:$0xf] %vm294, %v292
        %296 = vst.msk [vmem:[%s223 + $0x4] sm:$0xf] %vm294, %v293
        %s297 = sand.u32 %s113, 1
        %s298 = scalar_lea.sflag [#allocation4], %s297
        %s299 = sand.u32 %s113, 1
        %s300 = smul.addr %s299, 8
        %s301 = scalar_lea.vmem [#allocation7], %s300
        // Predicated region
        $region41: #{tpu_custom_call.1} parent=31 // pred_check
          %p302 = pneg %p123
        $region42: #{tpu_custom_call.1} parent=31 // pred_check_branch
          %304 = sbr.rel (%p302) target = $region44
        $region43: #{tpu_custom_call.1} parent=31 // pred_region
          %s305 = smul.u32 2, %s26
          %307 = vsyncadd %s298, 0
          %s308 = smul.addr %s25, 2
          %s309 = sadd.s32 %s305, %s308
          %s310 = smul.addr %s309, 4
          %s311 = scalar_lea.hbm %s3, %s310
          %s312 = sshll.u32 %s301, 4
          %s313 = int_to_ptr.vmem [resolvable:$true] %s312
          %s314 = sshll.u32 %s311, 4
          %s315 = int_to_ptr.hbm [resolvable:$true] %s314
          %320 = dma.vmem_to_hbm [thread:$0]  %s313, 128, %s315, %s298, 64, 64, 4
        $region44: #{tpu_custom_call.1} parent=31 // pred_fallthru
          _
      $region32: #{tpu_custom_call.1} parent=5 // pred_fallthru
        _
      %p321 = scmp.le.s32.totalorder 2, %s16
      // Predicated region
      $region45: #{tpu_custom_call.1} parent=5 // pred_check
        %p322 = pneg %p321
      $region46: #{tpu_custom_call.1} parent=5 // pred_check_branch
        %324 = sbr.rel (%p322) target = $region48
      $region47: #{tpu_custom_call.1} parent=5 // pred_region
        %s325 = ssub.s32 %s16, 2
        // Predicated region
        $region49: #{tpu_custom_call.1} parent=47 // pred_check
          %p326 = pneg %p129
        $region50: #{tpu_custom_call.1} parent=47 // pred_check_branch
          %328 = sbr.rel (%p326) target = $region52
        $region51: #{tpu_custom_call.1} parent=47 // pred_region
          %s329 = sand.u32 %s114, 1
          %s330 = scalar_lea.sflag [#allocation4], %s329
          %s331 = sand.u32 %s114, 1
          %s332 = smul.addr %s331, 8
          %s333 = scalar_lea.vmem [#allocation7], %s332
          %335 = dma.done %s330, 128
        $region52: #{tpu_custom_call.1} parent=47 // pred_fallthru
          _
      $region48: #{tpu_custom_call.1} parent=5 // pred_fallthru
        _
    $region6: #{tpu_custom_call.1} parent=1 // loop_footer
      %s20 = sadd.s32 1, %s16
    $region7: #{tpu_custom_call.1} parent=1 // loop_footer_branch
      %15 = sbr.rel target = $region3
    $region8: #{tpu_custom_call.1} parent=1 // loop_exit
      _
    %336 = vsyncpa [#allocation3], 1
    %s337 = scalar_lea.sflag [#allocation3], 1
    %338 = vsyncpa %s337, 1
    %339 = vsyncpa [#allocation6], 1
    %340 = vsyncpa [#allocation4], 1
    %s341 = scalar_lea.sflag [#allocation4], 1
    %342 = vsyncpa %s341, 1

</llo_original>
